<compile_context>
chip_gen: v7x
topology: tpu7x:2x2x1
jax: 0.10.0
libtpu: 0.0.40
codegen_flags: <defaults>
</compile_context>

<pallas_src>
import jax
import jax.numpy as jnp
from jax.experimental import pallas as pl
from jax.experimental.pallas import tpu as pltpu

# ----------------------------- config (opt) ---------------------------------
BERT_DIM = 32        # opt.bert_dim
POLARITIES = 3       # opt.polarities_dim
HOPS = 3             # opt.hops
VOCAB = 30
BATCH = 2
MEM_SEQ = 8          # raw memory token length
ASP_SEQ = 4          # raw aspect token length


# ------------------------------ Pallas kernel --------------------------------
def ram_kernel(mem_ref, slab_ref, out_ref):
    # Single invocation (no grid):
    #   mem_ref : (B, S, D)      memory embeddings, batch on sublanes
    #   slab_ref: (3D+8, LANE)   packed parameters (one DMA)
    #   out_ref : (B, LANE)      lane-padded logits
    B, S, D = mem_ref.shape
    mem = mem_ref[...]                                   # (B, S, D) f32

    # ---- unpack parameter slab (static, 8-row-aligned slices) ----
    w_i  = slab_ref[pl.ds(0, D), :]                      # (D, LANE) input-side fused GRU W
    w_h  = slab_ref[pl.ds(D, D), :]                      # (D, LANE) hidden-side fused GRU W
    dw   = slab_ref[pl.ds(2 * D, D), :]                  # (D, LANE) dense W^T, lane-padded
    tail = slab_ref[pl.ds(3 * D, 8), :]                  # (8, LANE) row-packed vectors
    wm    = tail[0:1, :D]                                # (1, D)    att_linear weight (memory half)
    b_gru = tail[1:2, :]                                 # (1, LANE) fused GRU bias
    db    = tail[2:3, :]                                 # (1, LANE) dense bias, lane-padded

    # ---- attention (hop-invariant): the (et + aspect) @ wc + bias term is
    # constant over the sequence axis and cancels exactly inside softmax, so
    # alpha depends only on memory @ wm and is the same in every hop.
    logits = jnp.sum(mem * wm, axis=-1)                  # (B, S)   lane reduce (XLU)
    logits = logits - jnp.max(logits, axis=-1, keepdims=True)
    e = jnp.exp(logits)                                  # EUP
    alpha = e / jnp.sum(e, axis=-1, keepdims=True)       # (B, S)

    # weighted sum stays on the VPU/XLU: (B,S,1)*(B,S,D) -> sublane reduce.
    # (Only worth moving back to the MXU if S*D grows into the hundreds.)
    i_vec = jnp.sum(alpha[..., None] * mem, axis=1)      # (B, D)

    # Hop-invariant input-side GRU contribution (fused column layout):
    #   cols [0:D) r-gate | [D:2D) z-gate | [2D:3D) i_n (+b_ih_n) | [3D:4D) b_hh_n
    gi = jnp.dot(i_vec, w_i, preferred_element_type=jnp.float32) + b_gru   # (B, 4D)

    et = jnp.zeros((B, D), jnp.float32)
    for _ in range(HOPS):
        # Only the hidden-side matmul depends on et: (B, D) x (D, 4D), M = B.
        gh = jnp.dot(et, w_h, preferred_element_type=jnp.float32)          # (B, 4D)
        gates = gi + gh
        r = jax.nn.sigmoid(gates[:, 0:D])
        z = jax.nn.sigmoid(gates[:, D:2 * D])
        n = jnp.tanh(gates[:, 2 * D:3 * D] + r * gates[:, 3 * D:4 * D])
        et = (1.0 - z) * n + z * et
        # TODO(synk): lane-aligning the r / h_n columns could shave a few XLU
        # rotates per hop; skipped pending a bundle-dump check at D=32.

    # dense head: lane-dense (B, LANE) store; wrapper slices [:, :P]
    out_ref[...] = jnp.dot(et, dw, preferred_element_type=jnp.float32) + db


# ------------------------------- packing --------------------------------------
def pack_params(params, D, P):
    """Pack all parameters into ONE (3D+8, LANE) f32 slab (done once).

    Row layout:
      [0,   D)  : input-side fused GRU weight  W_i (D,4D)  cols [r | z | i_n | 0 ]
      [D,  2D)  : hidden-side fused GRU weight W_h (D,4D)  cols [r | z | 0   | h_n]
      [2D, 3D)  : dense weight^T (D, P), lane-padded
      3D + 0    : att_linear weight, memory half (aspect half cancels in softmax)
      3D + 1    : fused GRU bias (4D)
      3D + 2    : dense bias (P)
    """
    lane = max(128, ((4 * D + 127) // 128) * 128)
    wih, whh = params["gru_w_ih"], params["gru_w_hh"]     # (3D, D) in r|z|n row order
    zero = jnp.zeros((D, D), jnp.float32)
    w_i = jnp.concatenate([wih[:D].T, wih[D:2 * D].T, wih[2 * D:].T, zero], axis=1)
    w_h = jnp.concatenate([whh[:D].T, whh[D:2 * D].T, zero, whh[2 * D:].T], axis=1)
    bih, bhh = params["gru_b_ih"], params["gru_b_hh"]
    b_gru = jnp.concatenate([bih[:D] + bhh[:D], bih[D:2 * D] + bhh[D:2 * D],
                             bih[2 * D:], bhh[2 * D:]])   # (4D,)

    slab = jnp.zeros((3 * D + 8, lane), jnp.float32)
    slab = slab.at[0:D, 0:4 * D].set(w_i)
    slab = slab.at[D:2 * D, 0:4 * D].set(w_h)
    slab = slab.at[2 * D:3 * D, 0:P].set(params["dense_w"].T)
    slab = slab.at[3 * D, 0:D].set(params["att_w"][0, :D])
    slab = slab.at[3 * D + 1, 0:4 * D].set(b_gru)
    slab = slab.at[3 * D + 2, 0:P].set(params["dense_b"])
    return slab


# ------------------------------- wrapper --------------------------------------
def ram_bert_pallas(mem_emb, slab, P):
    """Run the RAM hops + dense head.  `slab` is the pre-packed parameter slab.

    NOTE: the aspect vector is provably irrelevant to the output of this module
    (its attention contribution is constant over the sequence axis and cancels
    in softmax), so it is not passed to the kernel at all.
    """
    B, S, D = mem_emb.shape
    lane = slab.shape[1]
    # TODO(synk): for production batch sizes, add a batch grid with 128-256-row
    # blocks (multiple of 8) and dimension_semantics=("parallel",); at B=2 a
    # single invocation avoids all per-grid-step / megacore-split overhead.
    out = pl.pallas_call(
        ram_kernel,
        out_shape=jax.ShapeDtypeStruct((B, lane), jnp.float32),
        in_specs=[
            pl.BlockSpec(memory_space=pltpu.MemorySpace.VMEM),   # memory embeddings
            pl.BlockSpec(memory_space=pltpu.MemorySpace.VMEM),   # parameter slab
        ],
        out_specs=pl.BlockSpec(memory_space=pltpu.MemorySpace.VMEM),
    )(mem_emb, slab)
    return out[:, :P]


# ----------------------------- pure-JAX reference ----------------------------
def ram_bert_ref(mem_emb, asp_vec, params):
    """Literal translation of the PyTorch forward (uses wc and att_b, no hoisting)."""
    B, S, D = mem_emb.shape
    et = jnp.zeros((B, D), jnp.float32)
    for _ in range(HOPS):
        ctx = jnp.zeros((B, S, D)) + et[:, None, :] + asp_vec[:, None, :]
        x = jnp.concatenate([mem_emb, ctx], axis=-1)          # (B, S, 2D)
        g = x @ params["att_w"].T + params["att_b"]           # (B, S, 1)
        alpha = jax.nn.softmax(g, axis=1)
        i = jnp.einsum("bsk,bsd->bkd", alpha, mem_emb)[:, 0]  # (B, D)
        gi = i @ params["gru_w_ih"].T + params["gru_b_ih"]
        gh = et @ params["gru_w_hh"].T + params["gru_b_hh"]
        r = jax.nn.sigmoid(gi[:, :D] + gh[:, :D])
        z = jax.nn.sigmoid(gi[:, D:2 * D] + gh[:, D:2 * D])
        n = jnp.tanh(gi[:, 2 * D:] + r * gh[:, 2 * D:])
        et = (1.0 - z) * n + z * et
    return et @ params["dense_w"].T + params["dense_b"]


# ----------------------------------- main -------------------------------------
if __name__ == "__main__":
    key = jax.random.PRNGKey(0)
    keys = jax.random.split(key, 10)

    D, P = BERT_DIM, POLARITIES

    # ---- deterministic parameters ----
    params = {
        "att_w": 0.1 * jax.random.normal(keys[0], (1, 2 * D), jnp.float32),
        "att_b": 0.1 * jax.random.normal(keys[1], (1,), jnp.float32),
        "gru_w_ih": 0.1 * jax.random.normal(keys[2], (3 * D, D), jnp.float32),
        "gru_w_hh": 0.1 * jax.random.normal(keys[3], (3 * D, D), jnp.float32),
        "gru_b_ih": 0.1 * jax.random.normal(keys[4], (3 * D,), jnp.float32),
        "gru_b_hh": 0.1 * jax.random.normal(keys[5], (3 * D,), jnp.float32),
        "dense_w": 0.1 * jax.random.normal(keys[6], (P, D), jnp.float32),
        "dense_b": 0.1 * jax.random.normal(keys[7], (P,), jnp.float32),
    }
    # TODO(synk): real BERT encoder not implemented; synthetic embedding table
    # stands in for `self.bert` (only sequence_output is used downstream).
    emb_table = 0.1 * jax.random.normal(keys[8], (VOCAB, D), jnp.float32)

    # ---- deterministic token-id inputs (0 = pad) ----
    mem_ids = jax.random.randint(keys[9], (BATCH, MEM_SEQ), 1, VOCAB)
    mem_ids = mem_ids.at[0, 6:].set(0)                         # batch 0: len 6
    asp_ids = jax.random.randint(jax.random.fold_in(key, 99),
                                 (BATCH, ASP_SEQ), 1, VOCAB)
    asp_ids = asp_ids.at[0, 2:].set(0)                         # batch 0: len 2
    asp_ids = asp_ids.at[1, 3:].set(0)                         # batch 1: len 3

    # ---- glue (matches forward() preamble) ----
    memory_len = jnp.sum(mem_ids != 0, axis=-1)
    aspect_len = jnp.sum(asp_ids != 0, axis=-1)

    # SqueezeEmbedding: pack to batch-max non-pad length (static truncation).
    mem_max = int(jnp.max(memory_len))
    asp_max = int(jnp.max(aspect_len))
    mem_ids_sq = mem_ids[:, :mem_max]
    asp_ids_sq = asp_ids[:, :asp_max]

    # "BERT" = embedding lookup; dropout = identity (eval).
    mem_emb = emb_table[mem_ids_sq]                            # (B, S, D)
    asp_emb = emb_table[asp_ids_sq]                            # (B, Sa, D)

    # aspect = sum over squeezed length / aspect_len (same as the PyTorch code;
    # pad positions of shorter aspects are included in the sum).  It is computed
    # for module fidelity / the reference, but provably does not affect the
    # output (cancels inside softmax), so the kernel never touches it.
    asp_vec = jnp.sum(asp_emb, axis=1) / aspect_len.astype(jnp.float32)[:, None]

    # ---- pack parameters ONCE (pure function of the weights) ----
    slab = pack_params(params, D, P)

    # ---- run Pallas kernel ----
    out = ram_bert_pallas(mem_emb, slab, P)
    out = jax.block_until_ready(out)

    # ---- correctness check vs. pure-JAX reference (non-hoisted math) ----
    ref = ram_bert_ref(mem_emb, asp_vec, params)
    assert out.shape == (BATCH, POLARITIES)
    assert jnp.allclose(out, ref, atol=1e-4, rtol=1e-4), (out, ref)

    print("KERNEL_OK")
</pallas_src>

<mosaic_0001>
module attributes {stable_mosaic.version = 11 : i64} {
  func.func @ram_kernel(%arg0: memref<2x8x32xf32, #tpu.memory_space<vmem>>, %arg1: memref<104x128xf32, #tpu.memory_space<vmem>>, %arg2: memref<2x128xf32, #tpu.memory_space<vmem>>) attributes {dimension_semantics = [], scalar_prefetch = 0 : i64, scratch_operands = 0 : i64, tpu.core_type = #tpu.core_type<tc>} {
    %c0 = arith.constant 0 : index
    %c0_0 = arith.constant 0 : index
    %c0_1 = arith.constant 0 : index
    %0 = vector.load %arg0[%c0, %c0_0, %c0_1] : memref<2x8x32xf32, #tpu.memory_space<vmem>>, vector<2x8x32xf32>
    %c0_2 = arith.constant 0 : index
    %c0_3 = arith.constant 0 : index
    %1 = vector.load %arg1[%c0_2, %c0_3] : memref<104x128xf32, #tpu.memory_space<vmem>>, vector<32x128xf32>
    %c32 = arith.constant 32 : index
    %c0_4 = arith.constant 0 : index
    %2 = vector.load %arg1[%c32, %c0_4] : memref<104x128xf32, #tpu.memory_space<vmem>>, vector<32x128xf32>
    %c64 = arith.constant 64 : index
    %c0_5 = arith.constant 0 : index
    %3 = vector.load %arg1[%c64, %c0_5] : memref<104x128xf32, #tpu.memory_space<vmem>>, vector<32x128xf32>
    %c96 = arith.constant 96 : index
    %c0_6 = arith.constant 0 : index
    %4 = vector.load %arg1[%c96, %c0_6] : memref<104x128xf32, #tpu.memory_space<vmem>>, vector<8x128xf32>
    %5 = vector.extract_strided_slice %4 {offsets = [0, 0], sizes = [1, 32], strides = [1, 1]} : vector<8x128xf32> to vector<1x32xf32>
    %6 = vector.extract_strided_slice %4 {offsets = [1, 0], sizes = [1, 128], strides = [1, 1]} : vector<8x128xf32> to vector<1x128xf32>
    %7 = vector.extract_strided_slice %4 {offsets = [2, 0], sizes = [1, 128], strides = [1, 1]} : vector<8x128xf32> to vector<1x128xf32>
    %8 = vector.shape_cast %5 : vector<1x32xf32> to vector<1x1x32xf32>
    %9 = vector.broadcast %8 : vector<1x1x32xf32> to vector<2x8x32xf32>
    %10 = arith.mulf %0, %9 : vector<2x8x32xf32>
    %cst = arith.constant dense<0.000000e+00> : vector<2x8xf32>
    %11 = vector.multi_reduction <add>, %10, %cst [2] : vector<2x8x32xf32> to vector<2x8xf32>
    %cst_7 = arith.constant dense<0xFF800000> : vector<2xf32>
    %12 = vector.multi_reduction <maximumf>, %11, %cst_7 [1] : vector<2x8xf32> to vector<2xf32>
    %13 = vector.shape_cast %12 : vector<2xf32> to vector<2x1xf32>
    %14 = vector.broadcast %13 : vector<2x1xf32> to vector<2x8xf32>
    %15 = arith.subf %11, %14 : vector<2x8xf32>
    %16 = math.exp %15 : vector<2x8xf32>
    %cst_8 = arith.constant dense<0.000000e+00> : vector<2xf32>
    %17 = vector.multi_reduction <add>, %16, %cst_8 [1] : vector<2x8xf32> to vector<2xf32>
    %18 = vector.shape_cast %17 : vector<2xf32> to vector<2x1xf32>
    %19 = vector.broadcast %18 : vector<2x1xf32> to vector<2x8xf32>
    %20 = arith.divf %16, %19 : vector<2x8xf32>
    %21 = vector.shape_cast %20 : vector<2x8xf32> to vector<2x8x1xf32>
    %22 = vector.broadcast %21 : vector<2x8x1xf32> to vector<2x8x32xf32>
    %23 = arith.mulf %22, %0 : vector<2x8x32xf32>
    %cst_9 = arith.constant dense<0.000000e+00> : vector<2x32xf32>
    %24 = vector.multi_reduction <add>, %23, %cst_9 [1] : vector<2x8x32xf32> to vector<2x32xf32>
    %cst_10 = arith.constant dense<0.000000e+00> : vector<2x128xf32>
    %25 = tpu.matmul %24, %1, %cst_10 {dimension_numbers = #tpu.dot_dimension_numbers<[1], [0], [0], [1], [0, 0, 1, 1], [], []>} : vector<2x32xf32>, vector<32x128xf32>, vector<2x128xf32> -> vector<2x128xf32>
    %26 = vector.broadcast %6 : vector<1x128xf32> to vector<2x128xf32>
    %27 = arith.addf %25, %26 : vector<2x128xf32>
    %cst_11 = arith.constant 0.000000e+00 : f32
    %28 = vector.broadcast %cst_11 : f32 to vector<2x32xf32>
    %cst_12 = arith.constant dense<0.000000e+00> : vector<2x128xf32>
    %29 = tpu.matmul %28, %2, %cst_12 {dimension_numbers = #tpu.dot_dimension_numbers<[1], [0], [0], [1], [0, 0, 1, 1], [], []>} : vector<2x32xf32>, vector<32x128xf32>, vector<2x128xf32> -> vector<2x128xf32>
    %30 = arith.addf %27, %29 : vector<2x128xf32>
    %31 = vector.extract_strided_slice %30 {offsets = [0, 0], sizes = [2, 32], strides = [1, 1]} : vector<2x128xf32> to vector<2x32xf32>
    %32 = arith.negf %31 : vector<2x32xf32>
    %33 = math.exp %32 : vector<2x32xf32>
    %cst_13 = arith.constant 1.000000e+00 : f32
    %34 = vector.broadcast %cst_13 : f32 to vector<2x32xf32>
    %35 = arith.addf %34, %33 : vector<2x32xf32>
    %36 = arith.divf %34, %35 : vector<2x32xf32>
    %37 = vector.extract_strided_slice %30 {offsets = [0, 32], sizes = [2, 32], strides = [1, 1]} : vector<2x128xf32> to vector<2x32xf32>
    %38 = arith.negf %37 : vector<2x32xf32>
    %39 = math.exp %38 : vector<2x32xf32>
    %cst_14 = arith.constant 1.000000e+00 : f32
    %40 = vector.broadcast %cst_14 : f32 to vector<2x32xf32>
    %41 = arith.addf %40, %39 : vector<2x32xf32>
    %42 = arith.divf %40, %41 : vector<2x32xf32>
    %43 = vector.extract_strided_slice %30 {offsets = [0, 64], sizes = [2, 32], strides = [1, 1]} : vector<2x128xf32> to vector<2x32xf32>
    %44 = vector.extract_strided_slice %30 {offsets = [0, 96], sizes = [2, 32], strides = [1, 1]} : vector<2x128xf32> to vector<2x32xf32>
    %45 = arith.mulf %36, %44 : vector<2x32xf32>
    %46 = arith.addf %43, %45 : vector<2x32xf32>
    %47 = math.tanh %46 : vector<2x32xf32>
    %cst_15 = arith.constant 1.000000e+00 : f32
    %48 = vector.broadcast %cst_15 : f32 to vector<2x32xf32>
    %49 = arith.subf %48, %42 : vector<2x32xf32>
    %50 = arith.mulf %49, %47 : vector<2x32xf32>
    %51 = arith.mulf %42, %28 : vector<2x32xf32>
    %52 = arith.addf %50, %51 : vector<2x32xf32>
    %cst_16 = arith.constant dense<0.000000e+00> : vector<2x128xf32>
    %53 = tpu.matmul %52, %2, %cst_16 {dimension_numbers = #tpu.dot_dimension_numbers<[1], [0], [0], [1], [0, 0, 1, 1], [], []>} : vector<2x32xf32>, vector<32x128xf32>, vector<2x128xf32> -> vector<2x128xf32>
    %54 = arith.addf %27, %53 : vector<2x128xf32>
    %55 = vector.extract_strided_slice %54 {offsets = [0, 0], sizes = [2, 32], strides = [1, 1]} : vector<2x128xf32> to vector<2x32xf32>
    %56 = arith.negf %55 : vector<2x32xf32>
    %57 = math.exp %56 : vector<2x32xf32>
    %cst_17 = arith.constant 1.000000e+00 : f32
    %58 = vector.broadcast %cst_17 : f32 to vector<2x32xf32>
    %59 = arith.addf %58, %57 : vector<2x32xf32>
    %60 = arith.divf %58, %59 : vector<2x32xf32>
    %61 = vector.extract_strided_slice %54 {offsets = [0, 32], sizes = [2, 32], strides = [1, 1]} : vector<2x128xf32> to vector<2x32xf32>
    %62 = arith.negf %61 : vector<2x32xf32>
    %63 = math.exp %62 : vector<2x32xf32>
    %cst_18 = arith.constant 1.000000e+00 : f32
    %64 = vector.broadcast %cst_18 : f32 to vector<2x32xf32>
    %65 = arith.addf %64, %63 : vector<2x32xf32>
    %66 = arith.divf %64, %65 : vector<2x32xf32>
    %67 = vector.extract_strided_slice %54 {offsets = [0, 64], sizes = [2, 32], strides = [1, 1]} : vector<2x128xf32> to vector<2x32xf32>
    %68 = vector.extract_strided_slice %54 {offsets = [0, 96], sizes = [2, 32], strides = [1, 1]} : vector<2x128xf32> to vector<2x32xf32>
    %69 = arith.mulf %60, %68 : vector<2x32xf32>
    %70 = arith.addf %67, %69 : vector<2x32xf32>
    %71 = math.tanh %70 : vector<2x32xf32>
    %cst_19 = arith.constant 1.000000e+00 : f32
    %72 = vector.broadcast %cst_19 : f32 to vector<2x32xf32>
    %73 = arith.subf %72, %66 : vector<2x32xf32>
    %74 = arith.mulf %73, %71 : vector<2x32xf32>
    %75 = arith.mulf %66, %52 : vector<2x32xf32>
    %76 = arith.addf %74, %75 : vector<2x32xf32>
    %cst_20 = arith.constant dense<0.000000e+00> : vector<2x128xf32>
    %77 = tpu.matmul %76, %2, %cst_20 {dimension_numbers = #tpu.dot_dimension_numbers<[1], [0], [0], [1], [0, 0, 1, 1], [], []>} : vector<2x32xf32>, vector<32x128xf32>, vector<2x128xf32> -> vector<2x128xf32>
    %78 = arith.addf %27, %77 : vector<2x128xf32>
    %79 = vector.extract_strided_slice %78 {offsets = [0, 0], sizes = [2, 32], strides = [1, 1]} : vector<2x128xf32> to vector<2x32xf32>
    %80 = arith.negf %79 : vector<2x32xf32>
    %81 = math.exp %80 : vector<2x32xf32>
    %cst_21 = arith.constant 1.000000e+00 : f32
    %82 = vector.broadcast %cst_21 : f32 to vector<2x32xf32>
    %83 = arith.addf %82, %81 : vector<2x32xf32>
    %84 = arith.divf %82, %83 : vector<2x32xf32>
    %85 = vector.extract_strided_slice %78 {offsets = [0, 32], sizes = [2, 32], strides = [1, 1]} : vector<2x128xf32> to vector<2x32xf32>
    %86 = arith.negf %85 : vector<2x32xf32>
    %87 = math.exp %86 : vector<2x32xf32>
    %cst_22 = arith.constant 1.000000e+00 : f32
    %88 = vector.broadcast %cst_22 : f32 to vector<2x32xf32>
    %89 = arith.addf %88, %87 : vector<2x32xf32>
    %90 = arith.divf %88, %89 : vector<2x32xf32>
    %91 = vector.extract_strided_slice %78 {offsets = [0, 64], sizes = [2, 32], strides = [1, 1]} : vector<2x128xf32> to vector<2x32xf32>
    %92 = vector.extract_strided_slice %78 {offsets = [0, 96], sizes = [2, 32], strides = [1, 1]} : vector<2x128xf32> to vector<2x32xf32>
    %93 = arith.mulf %84, %92 : vector<2x32xf32>
    %94 = arith.addf %91, %93 : vector<2x32xf32>
    %95 = math.tanh %94 : vector<2x32xf32>
    %cst_23 = arith.constant 1.000000e+00 : f32
    %96 = vector.broadcast %cst_23 : f32 to vector<2x32xf32>
    %97 = arith.subf %96, %90 : vector<2x32xf32>
    %98 = arith.mulf %97, %95 : vector<2x32xf32>
    %99 = arith.mulf %90, %76 : vector<2x32xf32>
    %100 = arith.addf %98, %99 : vector<2x32xf32>
    %cst_24 = arith.constant dense<0.000000e+00> : vector<2x128xf32>
    %101 = tpu.matmul %100, %3, %cst_24 {dimension_numbers = #tpu.dot_dimension_numbers<[1], [0], [0], [1], [0, 0, 1, 1], [], []>} : vector<2x32xf32>, vector<32x128xf32>, vector<2x128xf32> -> vector<2x128xf32>
    %102 = vector.broadcast %7 : vector<1x128xf32> to vector<2x128xf32>
    %103 = arith.addf %101, %102 : vector<2x128xf32>
    %c0_25 = arith.constant 0 : index
    %c0_26 = arith.constant 0 : index
    %104 = vector.load %arg2[%c0_25, %c0_26] : memref<2x128xf32, #tpu.memory_space<vmem>>, vector<2x128xf32>
    tpu.vector_store %arg2[%c0_25, %c0_26], %103 {strides = array<i32>} : memref<2x128xf32, #tpu.memory_space<vmem>>, vector<2x128xf32>,
    return
  }
}

</mosaic_0001>

<llo_original>
// kernel: tpu_custom_call.1
$region0: #{tpu_custom_call.1}
  #allocation0 [shape = 'u32[]', space=smem, size = 0x4, offset = 0x4, fixed_abs, tag = 'smem constant byte address 0x4 - core index']
  #allocation1 [shape = 'u32[144,128]{1,0:T(1,128)}', space=vmem, size = 0x12000, scoped, tag = 'internal scratch']
  %s0 = inlined_call_operand.hbm [shape: f32[2,8,32], index: 0, kind: input, shape index: {}]
  %s1 = inlined_call_operand.hbm [shape: f32[104,128], index: 1, kind: input, shape index: {}]
  %s2 = inlined_call_operand.hbm [shape: f32[2,128], index: 2, kind: output, shape index: {}]
  %s3 = sld [smem:[#allocation0]]
  $region26: #{tpu_custom_call.1} parent=0
    _
  %s5 = ssub.s32 1, %s3
  %s6 = scalar_select 0, %s5, %s3
  $region1: #{tpu_custom_call.1} parent=0
    #allocation2 [shape = 'u8[8192]{0}', space=vmem, size = 0x2000, scoped, tag = 'input window, operand 0, single buffered']
    #allocation3 [shape = 's32[1]{0}', space=sflag, size = 0x4, scoped, tag = 'scoped memory for tpu_custom_call.1']
    #allocation4 [shape = 's32[1]{0}', space=sflag, size = 0x4, scoped, tag = 'scoped memory for tpu_custom_call.1']
    #allocation5 [shape = 'u8[53248]{0}', space=vmem, size = 0xd000, scoped, tag = 'input window, operand 1, single buffered']
    #allocation6 [shape = 's32[1]{0}', space=sflag, size = 0x4, scoped, tag = 'scoped memory for tpu_custom_call.1']
    #allocation7 [shape = 'u8[1024]{0}', space=vmem, size = 0x400, scoped, tag = 'output window, operand 0, single buffered']
    %7 = vsyncpa [#allocation3], 0
    %8 = vsyncpa [#allocation6], 0
    %9 = vsyncpa [#allocation4], 0
    // Predicated region
    $region2: #{tpu_custom_call.1} parent=1 // pred_check
      _
    $region3: #{tpu_custom_call.1} parent=1 // pred_check_branch
      %11 = sbr.rel (0) target = $region5
    $region4: #{tpu_custom_call.1} parent=1 // pred_region
      %s13 = ssub.s32 256, 256
      %14 = vsyncadd [#allocation3], %s13
      %s15 = sshll.u32 [#allocation2], 4
      %s16 = int_to_ptr.vmem [resolvable:$true] %s15
      %21 = dma.hbm_to_vmem [thread:$0]  %s0, 256, %s16, [#allocation3], 128, 128, 8
    $region5: #{tpu_custom_call.1} parent=1 // pred_fallthru
      _
    // Predicated region
    $region6: #{tpu_custom_call.1} parent=1 // pred_check
      _
    $region7: #{tpu_custom_call.1} parent=1 // pred_check_branch
      %23 = sbr.rel (0) target = $region9
    $region8: #{tpu_custom_call.1} parent=1 // pred_region
      %s25 = ssub.s32 1664, 1664
      %26 = vsyncadd [#allocation6], %s25
      %s27 = sshll.u32 [#allocation5], 4
      %s28 = int_to_ptr.vmem [resolvable:$true] %s27
      %33 = dma.hbm_to_vmem [thread:$0]  %s1, 1664, %s28, [#allocation6], 128, 128, 8
    $region9: #{tpu_custom_call.1} parent=1 // pred_fallthru
      _
    // Predicated region
    $region10: #{tpu_custom_call.1} parent=1 // pred_check
      _
    $region11: #{tpu_custom_call.1} parent=1 // pred_check_branch
      %35 = sbr.rel (0) target = $region13
    $region12: #{tpu_custom_call.1} parent=1 // pred_region
      %36 = dma.done [#allocation3], 256
    $region13: #{tpu_custom_call.1} parent=1 // pred_fallthru
      _
    // Predicated region
    $region14: #{tpu_custom_call.1} parent=1 // pred_check
      _
    $region15: #{tpu_custom_call.1} parent=1 // pred_check_branch
      %38 = sbr.rel (0) target = $region17
    $region16: #{tpu_custom_call.1} parent=1 // pred_region
      %39 = dma.done [#allocation6], 1664
    $region17: #{tpu_custom_call.1} parent=1 // pred_fallthru
      _
    %v40 = vld [vmem:[#allocation2] sm:$0xff]
    %v41 = vld [vmem:[#allocation2 + $0x8] sm:$0xff]
    %v42 = vld [vmem:[#allocation5] sm:$0xff]
    %v43 = vld [vmem:[#allocation5 + $0x8] sm:$0xff]
    %v44 = vld [vmem:[#allocation5 + $0x10] sm:$0xff]
    %v45 = vld [vmem:[#allocation5 + $0x18] sm:$0xff]
    %v46 = vld [vmem:[#allocation5 + $0x20] sm:$0xff]
    %v47 = vld [vmem:[#allocation5 + $0x28] sm:$0xff]
    %v48 = vld [vmem:[#allocation5 + $0x30] sm:$0xff]
    %v49 = vld [vmem:[#allocation5 + $0x38] sm:$0xff]
    %v50 = vld [vmem:[#allocation5 + $0x40] sm:$0xff]
    %v51 = vld [vmem:[#allocation5 + $0x48] sm:$0xff]
    %v52 = vld [vmem:[#allocation5 + $0x50] sm:$0xff]
    %v53 = vld [vmem:[#allocation5 + $0x58] sm:$0xff]
    %v54 = vld [vmem:[#allocation5 + $0x60] sm:$0xff]
    %v55 = vlaneseq
    %v56 = vshrl.u32 %v55, 7
    %v57 = vsub.s32 0, %v56
    %v58 = vrot.slane %v54, %v57
    %v59 = vmul.f32 %v40, %v58
    %v60 = vmul.f32 %v41, %v58
    %vm61 = vcmask 261120
    %v62 = vsel %vm61, %v59, 0.0
    %63 = vadd.xlane.f32.xlu0 %v62
    %v64 = vpop.xlane.xlu0 %63
    %v65 = vsel %vm61, %v60, 0.0
    %66 = vadd.xlane.f32.xlu0 %v65
    %v67 = vpop.xlane.xlu0 %66
    %v70 = vlaneseq
    %v71 = vand.u32 %v70, 127
    %v72 = vlaneseq
    %v73 = vshrl.u32 %v72, 7
    %v74 = vsub.s32 %v71, %v73
    %v75 = vrot.slane %v64, %v74
    %v76 = vlaneseq
    %v77 = vshrl.u32 %v76, 7
    %v78 = vsub.s32 %v71, %v77
    %v79 = vrot.slane %v67, %v78
    %vm80 = vcmask 1041409
    %v81 = vsel %vm80, %v79, %v75
    %vm83 = vcmask 58368
    %v84 = vsel %vm83, %v81, -inf
    %85 = vmax.xlane.f32.xlu0 %v84
    %v86 = vpop.xlane.xlu0 %85
    %v88 = vlaneseq
    %v89 = vshrl.u32 %v88, 7
    %v90 = vsub.s32 0, %v89
    %v91 = vrot.slane %v86, %v90
    %v92 = vlaneseq
    %v93 = vshrl.u32 %v92, 7
    %v94 = vsub.s32 1, %v93
    %v95 = vrot.slane %v86, %v94
    %v98 = vsub.f32 %v64, %v91
    %v99 = vsub.f32 %v67, %v95
    %v100 = vmul.f32 %v98, 1.442695
    %v101 = vpow.pop %v100
    %v102 = vmul.f32 %v99, 1.442695
    %v103 = vpow.pop %v102
    %106 = vset.pattern.permute.xlu0 0
    %107 = vperm.xlu0 %106, %v101
    %v108 = vpop.permute.xlu0 %107
    %109 = vset.pattern.permute.xlu0 0
    %110 = vperm.xlu0 %109, %v103
    %v111 = vpop.permute.xlu0 %110
    %v112 = vlaneseq
    %v113 = vshrl.u32 %v112, 7
    %v114 = vsub.s32 %v71, %v113
    %v115 = vrot.slane %v108, %v114
    %v116 = vlaneseq
    %v117 = vshrl.u32 %v116, 7
    %v118 = vsub.s32 %v71, %v117
    %v119 = vrot.slane %v111, %v118
    %v120 = vsel %vm80, %v119, %v115
    %v122 = vsel %vm83, %v120, 0.0
    %123 = vadd.xlane.f32.xlu0 %v122
    %v124 = vpop.xlane.xlu0 %123
    %v126 = vlaneseq
    %v127 = vshrl.u32 %v126, 7
    %v128 = vsub.s32 0, %v127
    %v129 = vrot.slane %v124, %v128
    %v130 = vlaneseq
    %v131 = vshrl.u32 %v130, 7
    %v132 = vsub.s32 1, %v131
    %v133 = vrot.slane %v124, %v132
    %v136 = vrcp.pop %v129
    %v137 = vmul.f32 %v101, %v136
    %v138 = vrcp.pop %v133
    %v139 = vmul.f32 %v103, %v138
    %141 = vset.pattern.permute.xlu0 0
    %142 = vperm.xlu0 %141, %v137
    %v143 = vpop.permute.xlu0 %142
    %146 = vset.pattern.permute.xlu0 0
    %147 = vperm.xlu0 %146, %v139
    %v148 = vpop.permute.xlu0 %147
    %v150 = vmul.f32 %v143, %v40
    %v151 = vmul.f32 %v148, %v41
    %v152 = vsel %vm61, %v150, 0.0
    %v153 = vrot.slane %v152, 4
    %v154 = vadd.f32 %v152, %v153
    %v155 = vrot.slane %v154, 2
    %v156 = vadd.f32 %v154, %v155
    %v157 = vrot.slane %v156, 1
    %v158 = vadd.f32 %v156, %v157
    %v159 = vsel %vm61, %v151, 0.0
    %v160 = vrot.slane %v159, 4
    %v161 = vadd.f32 %v159, %v160
    %v162 = vrot.slane %v161, 2
    %v163 = vadd.f32 %v161, %v162
    %v164 = vrot.slane %v163, 1
    %v165 = vadd.f32 %v163, %v164
    %v166 = vlaneseq
    %v167 = vshrl.u32 %v166, 7
    %v168 = vsub.s32 1, %v167
    %v169 = vrot.slane %v54, %v168
    %v172 = vsel %vm80, %v165, %v158
    %v173 = vsel %vm61, %v172, 0
    %175 = vmatprep.subr.mxu0 0.0
    %176 = vmatpush1.msra.mxu0 %v42
    %177 = vmatprep.subr.mxu0 0.0
    %178 = vmatpush1.msra.mxu0 %v43
    %179 = vmatprep.subr.mxu0 0.0
    %180 = vmatpush1.msra.mxu0 %v44
    %181 = vmatprep.subr.mxu0 0.0
    %182 = vmatpush1.msra.mxu0 %v45
    %183 = vmatprep.subr.mxu0 0.0
    %184 = vmatpush1.msra.mxu0 0.0
    %185 = vmatprep.subr.mxu0 0.0
    %186 = vmatpush1.msra.mxu0 0.0
    %187 = vmatprep.subr.mxu0 0.0
    %188 = vmatpush1.msra.mxu0 0.0
    %189 = vmatprep.subr.mxu0 0.0
    %190 = vmatpush1.msra.mxu0 0.0
    %191 = vmatprep.subr.mxu0 0.0
    %192 = vmatpush1.msra.mxu0 0.0
    %193 = vmatprep.subr.mxu0 0.0
    %194 = vmatpush1.msra.mxu0 0.0
    %195 = vmatprep.subr.mxu0 0.0
    %196 = vmatpush1.msra.mxu0 0.0
    %197 = vmatprep.subr.mxu0 0.0
    %198 = vmatpush1.msra.mxu0 0.0
    %199 = vmatprep.subr.mxu0 0.0
    %200 = vmatpush1.msra.mxu0 0.0
    %201 = vmatprep.subr.mxu0 0.0
    %202 = vmatpush1.msra.mxu0 0.0
    %203 = vmatprep.subr.mxu0 0.0
    %204 = vmatpush1.msra.mxu0 0.0
    %205 = vmatprep.subr.mxu0 0.0
    %206 = vmatpush1.msra.mxu0 0.0
    %207 = vmatprep.subr.mxu0 0.0
    %208 = vmatpush1.msra.mxu0 0.0
    %209 = vmatprep.subr.mxu0 0.0
    %210 = vmatpush1.msra.mxu0 0.0
    %211 = vmatprep.subr.mxu0 0.0
    %212 = vmatpush1.msra.mxu0 0.0
    %213 = vmatprep.subr.mxu0 0.0
    %214 = vmatpush1.msra.mxu0 0.0
    %215 = vmatprep.subr.mxu0 0.0
    %216 = vmatpush1.msra.mxu0 0.0
    %217 = vmatprep.subr.mxu0 0.0
    %218 = vmatpush1.msra.mxu0 0.0
    %219 = vmatprep.subr.mxu0 0.0
    %220 = vmatpush1.msra.mxu0 0.0
    %221 = vmatprep.subr.mxu0 0.0
    %222 = vmatpush1.msra.mxu0 0.0
    %223 = vmatprep.subr.mxu0 0.0
    %224 = vmatpush1.msra.mxu0 0.0
    %225 = vmatprep.subr.mxu0 0.0
    %226 = vmatpush1.msra.mxu0 0.0
    %227 = vmatprep.subr.mxu0 0.0
    %228 = vmatpush1.msra.mxu0 0.0
    %229 = vmatprep.subr.mxu0 0.0
    %230 = vmatpush1.msra.mxu0 0.0
    %231 = vmatprep.subr.mxu0 0.0
    %232 = vmatpush1.msra.mxu0 0.0
    %233 = vmatprep.subr.mxu0 0.0
    %234 = vmatpush1.msra.mxu0 0.0
    %235 = vmatprep.subr.mxu0 0.0
    %236 = vmatpush1.msra.mxu0 0.0
    %237 = vmatprep.subr.mxu0 0.0
    %238 = vmatpush1.msra.mxu0 0.0
    %239 = vmatprep.mubr.f32.mxu0 0.0
    %240 = vmatmul.mubr.f32.gmra.mrb[0].mxu0 %v173
    %v241 = vpop.f32.mrb[0].mxu0
    %v242 = vadd.f32 %v169, %v241
    %v243 = vpop.f32.mrb[0].mxu0
    %244 = vdwg.mxu0
    %v246 = vsel %vm61, 0.0, 0
    %248 = vmatprep.subr.mxu0 0.0
    %249 = vmatpush1.msra.mxu0 %v46
    %250 = vmatprep.subr.mxu0 0.0
    %251 = vmatpush1.msra.mxu0 %v47
    %252 = vmatprep.subr.mxu0 0.0
    %253 = vmatpush1.msra.mxu0 %v48
    %254 = vmatprep.subr.mxu0 0.0
    %255 = vmatpush1.msra.mxu0 %v49
    %256 = vmatprep.subr.mxu0 0.0
    %257 = vmatpush1.msra.mxu0 0.0
    %258 = vmatprep.subr.mxu0 0.0
    %259 = vmatpush1.msra.mxu0 0.0
    %260 = vmatprep.subr.mxu0 0.0
    %261 = vmatpush1.msra.mxu0 0.0
    %262 = vmatprep.subr.mxu0 0.0
    %263 = vmatpush1.msra.mxu0 0.0
    %264 = vmatprep.subr.mxu0 0.0
    %265 = vmatpush1.msra.mxu0 0.0
    %266 = vmatprep.subr.mxu0 0.0
    %267 = vmatpush1.msra.mxu0 0.0
    %268 = vmatprep.subr.mxu0 0.0
    %269 = vmatpush1.msra.mxu0 0.0
    %270 = vmatprep.subr.mxu0 0.0
    %271 = vmatpush1.msra.mxu0 0.0
    %272 = vmatprep.subr.mxu0 0.0
    %273 = vmatpush1.msra.mxu0 0.0
    %274 = vmatprep.subr.mxu0 0.0
    %275 = vmatpush1.msra.mxu0 0.0
    %276 = vmatprep.subr.mxu0 0.0
    %277 = vmatpush1.msra.mxu0 0.0
    %278 = vmatprep.subr.mxu0 0.0
    %279 = vmatpush1.msra.mxu0 0.0
    %280 = vmatprep.subr.mxu0 0.0
    %281 = vmatpush1.msra.mxu0 0.0
    %282 = vmatprep.subr.mxu0 0.0
    %283 = vmatpush1.msra.mxu0 0.0
    %284 = vmatprep.subr.mxu0 0.0
    %285 = vmatpush1.msra.mxu0 0.0
    %286 = vmatprep.subr.mxu0 0.0
    %287 = vmatpush1.msra.mxu0 0.0
    %288 = vmatprep.subr.mxu0 0.0
    %289 = vmatpush1.msra.mxu0 0.0
    %290 = vmatprep.subr.mxu0 0.0
    %291 = vmatpush1.msra.mxu0 0.0
    %292 = vmatprep.subr.mxu0 0.0
    %293 = vmatpush1.msra.mxu0 0.0
    %294 = vmatprep.subr.mxu0 0.0
    %295 = vmatpush1.msra.mxu0 0.0
    %296 = vmatprep.subr.mxu0 0.0
    %297 = vmatpush1.msra.mxu0 0.0
    %298 = vmatprep.subr.mxu0 0.0
    %299 = vmatpush1.msra.mxu0 0.0
    %300 = vmatprep.subr.mxu0 0.0
    %301 = vmatpush1.msra.mxu0 0.0
    %302 = vmatprep.subr.mxu0 0.0
    %303 = vmatpush1.msra.mxu0 0.0
    %304 = vmatprep.subr.mxu0 0.0
    %305 = vmatpush1.msra.mxu0 0.0
    %306 = vmatprep.subr.mxu0 0.0
    %307 = vmatpush1.msra.mxu0 0.0
    %308 = vmatprep.subr.mxu0 0.0
    %309 = vmatpush1.msra.mxu0 0.0
    %310 = vmatprep.subr.mxu0 0.0
    %311 = vmatpush1.msra.mxu0 0.0
    %312 = vmatprep.mubr.f32.mxu0 0.0
    %313 = vmatmul.mubr.f32.gmra.mrb[0].mxu0 %v246
    %v314 = vpop.f32.mrb[0].mxu0
    %v315 = vadd.f32 0.0, %v314
    %v316 = vpop.f32.mrb[0].mxu0
    %317 = vdwg.mxu0
    %v318 = vadd.f32 %v242, %v315
    %v319 = vxor.u32 %v318, 2147483648
    %v320 = vmul.f32 %v319, 1.442695
    %v321 = vpow.pop %v320
    %v322 = vadd.f32 %v321, 1.0
    %v323 = vrcp.pop %v322
    %v324 = vmul.f32 1.0, %v323
    %326 = vrot.lane.b32.xlu0 %v318, 32
    %v327 = vpop.permute.xlu0 %326
    %v329 = vmul.f32 %v324, %v327
    %331 = vrot.lane.b32.xlu0 %v329, 64
    %v332 = vpop.permute.xlu0 %331
    %v334 = vadd.f32 %v318, %v332
    %v335 = vtanh.pop %v334
    %v336 = vsub.f32 1.0, %v324
    %338 = vrot.lane.b32.xlu0 %v335, 96
    %v339 = vpop.permute.xlu0 %338
    %v341 = vmul.f32 %v336, %v339
    %v342 = vmul.f32 %v324, 0.0
    %v343 = vadd.f32 %v341, %v342
    %345 = vrot.lane.b32.xlu0 %v343, 96
    %v346 = vpop.permute.xlu0 %345
    %v347 = vsel %vm61, %v346, 0
    %349 = vmatprep.subr.mxu0 0.0
    %350 = vmatpush1.msra.mxu0 %v46
    %351 = vmatprep.subr.mxu0 0.0
    %352 = vmatpush1.msra.mxu0 %v47
    %353 = vmatprep.subr.mxu0 0.0
    %354 = vmatpush1.msra.mxu0 %v48
    %355 = vmatprep.subr.mxu0 0.0
    %356 = vmatpush1.msra.mxu0 %v49
    %357 = vmatprep.subr.mxu0 0.0
    %358 = vmatpush1.msra.mxu0 0.0
    %359 = vmatprep.subr.mxu0 0.0
    %360 = vmatpush1.msra.mxu0 0.0
    %361 = vmatprep.subr.mxu0 0.0
    %362 = vmatpush1.msra.mxu0 0.0
    %363 = vmatprep.subr.mxu0 0.0
    %364 = vmatpush1.msra.mxu0 0.0
    %365 = vmatprep.subr.mxu0 0.0
    %366 = vmatpush1.msra.mxu0 0.0
    %367 = vmatprep.subr.mxu0 0.0
    %368 = vmatpush1.msra.mxu0 0.0
    %369 = vmatprep.subr.mxu0 0.0
    %370 = vmatpush1.msra.mxu0 0.0
    %371 = vmatprep.subr.mxu0 0.0
    %372 = vmatpush1.msra.mxu0 0.0
    %373 = vmatprep.subr.mxu0 0.0
    %374 = vmatpush1.msra.mxu0 0.0
    %375 = vmatprep.subr.mxu0 0.0
    %376 = vmatpush1.msra.mxu0 0.0
    %377 = vmatprep.subr.mxu0 0.0
    %378 = vmatpush1.msra.mxu0 0.0
    %379 = vmatprep.subr.mxu0 0.0
    %380 = vmatpush1.msra.mxu0 0.0
    %381 = vmatprep.subr.mxu0 0.0
    %382 = vmatpush1.msra.mxu0 0.0
    %383 = vmatprep.subr.mxu0 0.0
    %384 = vmatpush1.msra.mxu0 0.0
    %385 = vmatprep.subr.mxu0 0.0
    %386 = vmatpush1.msra.mxu0 0.0
    %387 = vmatprep.subr.mxu0 0.0
    %388 = vmatpush1.msra.mxu0 0.0
    %389 = vmatprep.subr.mxu0 0.0
    %390 = vmatpush1.msra.mxu0 0.0
    %391 = vmatprep.subr.mxu0 0.0
    %392 = vmatpush1.msra.mxu0 0.0
    %393 = vmatprep.subr.mxu0 0.0
    %394 = vmatpush1.msra.mxu0 0.0
    %395 = vmatprep.subr.mxu0 0.0
    %396 = vmatpush1.msra.mxu0 0.0
    %397 = vmatprep.subr.mxu0 0.0
    %398 = vmatpush1.msra.mxu0 0.0
    %399 = vmatprep.subr.mxu0 0.0
    %400 = vmatpush1.msra.mxu0 0.0
    %401 = vmatprep.subr.mxu0 0.0
    %402 = vmatpush1.msra.mxu0 0.0
    %403 = vmatprep.subr.mxu0 0.0
    %404 = vmatpush1.msra.mxu0 0.0
    %405 = vmatprep.subr.mxu0 0.0
    %406 = vmatpush1.msra.mxu0 0.0
    %407 = vmatprep.subr.mxu0 0.0
    %408 = vmatpush1.msra.mxu0 0.0
    %409 = vmatprep.subr.mxu0 0.0
    %410 = vmatpush1.msra.mxu0 0.0
    %411 = vmatprep.subr.mxu0 0.0
    %412 = vmatpush1.msra.mxu0 0.0
    %413 = vmatprep.mubr.f32.mxu0 0.0
    %414 = vmatmul.mubr.f32.gmra.mrb[0].mxu0 %v347
    %v415 = vpop.f32.mrb[0].mxu0
    %v416 = vadd.f32 0.0, %v415
    %v417 = vpop.f32.mrb[0].mxu0
    %418 = vdwg.mxu0
    %v419 = vadd.f32 %v242, %v416
    %v420 = vxor.u32 %v419, 2147483648
    %v421 = vmul.f32 %v420, 1.442695
    %v422 = vpow.pop %v421
    %v423 = vadd.f32 %v422, 1.0
    %v424 = vrcp.pop %v423
    %v425 = vmul.f32 1.0, %v424
    %427 = vrot.lane.b32.xlu0 %v419, 32
    %v428 = vpop.permute.xlu0 %427
    %v430 = vmul.f32 %v425, %v428
    %432 = vrot.lane.b32.xlu0 %v430, 64
    %v433 = vpop.permute.xlu0 %432
    %v435 = vadd.f32 %v419, %v433
    %v436 = vtanh.pop %v435
    %v437 = vsub.f32 1.0, %v425
    %439 = vrot.lane.b32.xlu0 %v436, 96
    %v440 = vpop.permute.xlu0 %439
    %v442 = vmul.f32 %v437, %v440
    %v443 = vmul.f32 %v425, %v343
    %v444 = vadd.f32 %v442, %v443
    %446 = vrot.lane.b32.xlu0 %v444, 96
    %v447 = vpop.permute.xlu0 %446
    %v448 = vsel %vm61, %v447, 0
    %450 = vmatprep.subr.mxu0 0.0
    %451 = vmatpush1.msra.mxu0 %v46
    %452 = vmatprep.subr.mxu0 0.0
    %453 = vmatpush1.msra.mxu0 %v47
    %454 = vmatprep.subr.mxu0 0.0
    %455 = vmatpush1.msra.mxu0 %v48
    %456 = vmatprep.subr.mxu0 0.0
    %457 = vmatpush1.msra.mxu0 %v49
    %458 = vmatprep.subr.mxu0 0.0
    %459 = vmatpush1.msra.mxu0 0.0
    %460 = vmatprep.subr.mxu0 0.0
    %461 = vmatpush1.msra.mxu0 0.0
    %462 = vmatprep.subr.mxu0 0.0
    %463 = vmatpush1.msra.mxu0 0.0
    %464 = vmatprep.subr.mxu0 0.0
    %465 = vmatpush1.msra.mxu0 0.0
    %466 = vmatprep.subr.mxu0 0.0
    %467 = vmatpush1.msra.mxu0 0.0
    %468 = vmatprep.subr.mxu0 0.0
    %469 = vmatpush1.msra.mxu0 0.0
    %470 = vmatprep.subr.mxu0 0.0
    %471 = vmatpush1.msra.mxu0 0.0
    %472 = vmatprep.subr.mxu0 0.0
    %473 = vmatpush1.msra.mxu0 0.0
    %474 = vmatprep.subr.mxu0 0.0
    %475 = vmatpush1.msra.mxu0 0.0
    %476 = vmatprep.subr.mxu0 0.0
    %477 = vmatpush1.msra.mxu0 0.0
    %478 = vmatprep.subr.mxu0 0.0
    %479 = vmatpush1.msra.mxu0 0.0
    %480 = vmatprep.subr.mxu0 0.0
    %481 = vmatpush1.msra.mxu0 0.0
    %482 = vmatprep.subr.mxu0 0.0
    %483 = vmatpush1.msra.mxu0 0.0
    %484 = vmatprep.subr.mxu0 0.0
    %485 = vmatpush1.msra.mxu0 0.0
    %486 = vmatprep.subr.mxu0 0.0
    %487 = vmatpush1.msra.mxu0 0.0
    %488 = vmatprep.subr.mxu0 0.0
    %489 = vmatpush1.msra.mxu0 0.0
    %490 = vmatprep.subr.mxu0 0.0
    %491 = vmatpush1.msra.mxu0 0.0
    %492 = vmatprep.subr.mxu0 0.0
    %493 = vmatpush1.msra.mxu0 0.0
    %494 = vmatprep.subr.mxu0 0.0
    %495 = vmatpush1.msra.mxu0 0.0
    %496 = vmatprep.subr.mxu0 0.0
    %497 = vmatpush1.msra.mxu0 0.0
    %498 = vmatprep.subr.mxu0 0.0
    %499 = vmatpush1.msra.mxu0 0.0
    %500 = vmatprep.subr.mxu0 0.0
    %501 = vmatpush1.msra.mxu0 0.0
    %502 = vmatprep.subr.mxu0 0.0
    %503 = vmatpush1.msra.mxu0 0.0
    %504 = vmatprep.subr.mxu0 0.0
    %505 = vmatpush1.msra.mxu0 0.0
    %506 = vmatprep.subr.mxu0 0.0
    %507 = vmatpush1.msra.mxu0 0.0
    %508 = vmatprep.subr.mxu0 0.0
    %509 = vmatpush1.msra.mxu0 0.0
    %510 = vmatprep.subr.mxu0 0.0
    %511 = vmatpush1.msra.mxu0 0.0
    %512 = vmatprep.subr.mxu0 0.0
    %513 = vmatpush1.msra.mxu0 0.0
    %514 = vmatprep.mubr.f32.mxu0 0.0
    %515 = vmatmul.mubr.f32.gmra.mrb[0].mxu0 %v448
    %v516 = vpop.f32.mrb[0].mxu0
    %v517 = vadd.f32 0.0, %v516
    %v518 = vpop.f32.mrb[0].mxu0
    %519 = vdwg.mxu0
    %v520 = vadd.f32 %v242, %v517
    %v521 = vxor.u32 %v520, 2147483648
    %v522 = vmul.f32 %v521, 1.442695
    %v523 = vpow.pop %v522
    %v524 = vadd.f32 %v523, 1.0
    %v525 = vrcp.pop %v524
    %v526 = vmul.f32 1.0, %v525
    %528 = vrot.lane.b32.xlu0 %v520, 32
    %v529 = vpop.permute.xlu0 %528
    %v531 = vmul.f32 %v526, %v529
    %533 = vrot.lane.b32.xlu0 %v531, 64
    %v534 = vpop.permute.xlu0 %533
    %v536 = vadd.f32 %v520, %v534
    %v537 = vtanh.pop %v536
    %v538 = vsub.f32 1.0, %v526
    %540 = vrot.lane.b32.xlu0 %v537, 96
    %v541 = vpop.permute.xlu0 %540
    %v543 = vmul.f32 %v538, %v541
    %v544 = vmul.f32 %v526, %v444
    %v545 = vadd.f32 %v543, %v544
    %v546 = vlaneseq
    %v547 = vshrl.u32 %v546, 7
    %v548 = vsub.s32 2, %v547
    %v549 = vrot.slane %v54, %v548
    %551 = vrot.lane.b32.xlu0 %v545, 96
    %v552 = vpop.permute.xlu0 %551
    %v553 = vsel %vm61, %v552, 0
    %555 = vmatprep.subr.mxu0 0.0
    %556 = vmatpush1.msra.mxu0 %v50
    %557 = vmatprep.subr.mxu0 0.0
    %558 = vmatpush1.msra.mxu0 %v51
    %559 = vmatprep.subr.mxu0 0.0
    %560 = vmatpush1.msra.mxu0 %v52
    %561 = vmatprep.subr.mxu0 0.0
    %562 = vmatpush1.msra.mxu0 %v53
    %563 = vmatprep.subr.mxu0 0.0
    %564 = vmatpush1.msra.mxu0 0.0
    %565 = vmatprep.subr.mxu0 0.0
    %566 = vmatpush1.msra.mxu0 0.0
    %567 = vmatprep.subr.mxu0 0.0
    %568 = vmatpush1.msra.mxu0 0.0
    %569 = vmatprep.subr.mxu0 0.0
    %570 = vmatpush1.msra.mxu0 0.0
    %571 = vmatprep.subr.mxu0 0.0
    %572 = vmatpush1.msra.mxu0 0.0
    %573 = vmatprep.subr.mxu0 0.0
    %574 = vmatpush1.msra.mxu0 0.0
    %575 = vmatprep.subr.mxu0 0.0
    %576 = vmatpush1.msra.mxu0 0.0
    %577 = vmatprep.subr.mxu0 0.0
    %578 = vmatpush1.msra.mxu0 0.0
    %579 = vmatprep.subr.mxu0 0.0
    %580 = vmatpush1.msra.mxu0 0.0
    %581 = vmatprep.subr.mxu0 0.0
    %582 = vmatpush1.msra.mxu0 0.0
    %583 = vmatprep.subr.mxu0 0.0
    %584 = vmatpush1.msra.mxu0 0.0
    %585 = vmatprep.subr.mxu0 0.0
    %586 = vmatpush1.msra.mxu0 0.0
    %587 = vmatprep.subr.mxu0 0.0
    %588 = vmatpush1.msra.mxu0 0.0
    %589 = vmatprep.subr.mxu0 0.0
    %590 = vmatpush1.msra.mxu0 0.0
    %591 = vmatprep.subr.mxu0 0.0
    %592 = vmatpush1.msra.mxu0 0.0
    %593 = vmatprep.subr.mxu0 0.0
    %594 = vmatpush1.msra.mxu0 0.0
    %595 = vmatprep.subr.mxu0 0.0
    %596 = vmatpush1.msra.mxu0 0.0
    %597 = vmatprep.subr.mxu0 0.0
    %598 = vmatpush1.msra.mxu0 0.0
    %599 = vmatprep.subr.mxu0 0.0
    %600 = vmatpush1.msra.mxu0 0.0
    %601 = vmatprep.subr.mxu0 0.0
    %602 = vmatpush1.msra.mxu0 0.0
    %603 = vmatprep.subr.mxu0 0.0
    %604 = vmatpush1.msra.mxu0 0.0
    %605 = vmatprep.subr.mxu0 0.0
    %606 = vmatpush1.msra.mxu0 0.0
    %607 = vmatprep.subr.mxu0 0.0
    %608 = vmatpush1.msra.mxu0 0.0
    %609 = vmatprep.subr.mxu0 0.0
    %610 = vmatpush1.msra.mxu0 0.0
    %611 = vmatprep.subr.mxu0 0.0
    %612 = vmatpush1.msra.mxu0 0.0
    %613 = vmatprep.subr.mxu0 0.0
    %614 = vmatpush1.msra.mxu0 0.0
    %615 = vmatprep.subr.mxu0 0.0
    %616 = vmatpush1.msra.mxu0 0.0
    %617 = vmatprep.subr.mxu0 0.0
    %618 = vmatpush1.msra.mxu0 0.0
    %619 = vmatprep.mubr.f32.mxu0 0.0
    %620 = vmatmul.mubr.f32.gmra.mrb[0].mxu0 %v553
    %v621 = vpop.f32.mrb[0].mxu0
    %v622 = vadd.f32 %v549, %v621
    %v623 = vpop.f32.mrb[0].mxu0
    %624 = vdwg.mxu0
    %625 = vst [vmem:[#allocation7] sm:$0x3] %v622
    // Predicated region
    $region18: #{tpu_custom_call.1} parent=1 // pred_check
      _
    $region19: #{tpu_custom_call.1} parent=1 // pred_check_branch
      %627 = sbr.rel (0) target = $region21
    $region20: #{tpu_custom_call.1} parent=1 // pred_region
      %s629 = ssub.s32 32, 32
      %630 = vsyncadd [#allocation4], %s629
      %s632 = sshll.u32 [#allocation7], 4
      %s633 = int_to_ptr.vmem [resolvable:$true] %s632
      %635 = dma.vmem_to_hbm [thread:$0]  %s633, 32, %s2, [#allocation4]
    $region21: #{tpu_custom_call.1} parent=1 // pred_fallthru
      _
    // Predicated region
    $region22: #{tpu_custom_call.1} parent=1 // pred_check
      _
    $region23: #{tpu_custom_call.1} parent=1 // pred_check_branch
      %637 = sbr.rel (0) target = $region25
    $region24: #{tpu_custom_call.1} parent=1 // pred_region
      %638 = dma.done [#allocation4], 32
    $region25: #{tpu_custom_call.1} parent=1 // pred_fallthru
      _
    %639 = vsyncpa [#allocation3], 1
    %640 = vsyncpa [#allocation6], 1
    %641 = vsyncpa [#allocation4], 1

</llo_original>
